<compile_context>
chip_gen: v6e
topology: v6e:2x2x1
jax: 0.10.0
libtpu: 0.0.40
codegen_flags: <defaults>
</compile_context>

<pallas_src>
import jax
import jax.numpy as jnp
import numpy as np
from jax.experimental import pallas as pl
from jax.experimental.pallas import tpu as pltpu

TAU = 2.0      # spikingjelly LIFNode default tau
V_TH = 1.0     # default v_threshold
BN_EPS = 1e-5  # nn.BatchNorm3d default eps


def _round_up(x, m):
    return ((x + m - 1) // m) * m


def _patch_embed_kernel(w_ref, p_ref, th_ref, o_ref):
    # (E, K) @ (K, tM) -> (E, tM): M sits on the lane axis (lane-dense output, full-width
    # unmasked stores), E on the sublane axis. Single K block -> no accumulator round-trip.
    acc = jnp.dot(w_ref[...], p_ref[...], preferred_element_type=jnp.float32)
    # Conv bias + eval-BN shift + LIF (v = y/tau ; spike = v >= v_th) are pre-folded into a
    # per-channel threshold:  spike = (W_scaled @ P >= tau*v_th - shift).
    o_ref[...] = (acc >= th_ref[...]).astype(o_ref.dtype)


def spiking_patch_embedding(x, weight, bias, gamma, beta, run_mean, run_var,
                            patch_size=(4, 4, 4), tm=1024):
    N, C, D, H, W = x.shape
    pd, ph, pw = patch_size
    E = weight.shape[0]
    Do, Ho, Wo = D // pd, H // ph, W // pw
    K = C * pd * ph * pw
    M = N * Do * Ho * Wo

    # Patchify directly into the (K, M) layout consumed by the kernel.
    # K ordering is channel-major within a patch, matching Conv3d weight layout (E, C, pd, ph, pw).
    patches = x.reshape(N, C, Do, pd, Ho, ph, Wo, pw)
    patches = patches.transpose(1, 3, 5, 7, 0, 2, 4, 6)   # C,pd,ph,pw, N,D',H',W'
    patches = patches.reshape(K, M)

    # Fold eval-mode BN scale into the weight matrix; fold conv bias, BN shift, 1/tau and
    # v_th into a single per-channel threshold (tau > 0 so the compare direction is preserved).
    s = gamma / jnp.sqrt(run_var + BN_EPS)
    w2d = (weight.reshape(E, K) * s[:, None]).astype(jnp.float32)    # (E, K), scale folded
    shift = (bias - run_mean) * s + beta                             # (E,)
    th = (TAU * V_TH - shift).reshape(E, 1).astype(jnp.float32)      # (E, 1)

    # Lane tile over M (multiple of 128); pad M so the grid divides evenly (no hard asserts).
    tM = max(128, min(_round_up(tm, 128), _round_up(M, 128)))
    # Keep the double-buffered f32 footprint modest so the same tiling is safe on v7x (64 MiB VMEM).
    while 4 * (2 * K * tM + 2 * E * tM + E * K + E) > 24 * 1024 * 1024 and tM > 128:
        tM -= 128
    M_pad = _round_up(M, tM)
    if M_pad != M:
        patches = jnp.pad(patches, ((0, 0), (0, M_pad - M)))

    out2d = pl.pallas_call(
        _patch_embed_kernel,
        out_shape=jax.ShapeDtypeStruct((E, M_pad), x.dtype),
        grid_spec=pltpu.PrefetchScalarGridSpec(
            num_scalar_prefetch=0,
            grid=(M_pad // tM,),
            in_specs=[
                pl.BlockSpec((E, K), lambda i: (0, 0)),    # scaled weight: fetched once, resident
                pl.BlockSpec((K, tM), lambda i: (0, i)),   # patch tile (full K, lane-tiled M)
                pl.BlockSpec((E, 1), lambda i: (0, 0)),    # per-channel threshold, resident
            ],
            out_specs=pl.BlockSpec((E, tM), lambda i: (0, i)),
        ),
        compiler_params=pltpu.CompilerParams(
            dimension_semantics=("parallel",)),            # M axis shards across TCs (v7x)
    )(w2d, patches, th)

    # (E, M) -> (N, E, D', H', W')  (PyTorch layout)
    out = out2d[:, :M].reshape(E, N, Do, Ho, Wo).transpose(1, 0, 2, 3, 4)
    return out


def reference(x, weight, bias, gamma, beta, run_mean, run_var, patch_size):
    """Pure-JAX reference of the same forward pass (returns spikes and membrane potential)."""
    y = jax.lax.conv_general_dilated(
        x, weight, window_strides=patch_size, padding="VALID",
        dimension_numbers=("NCDHW", "OIDHW", "NCDHW"))
    y = y + bias.reshape(1, -1, 1, 1, 1)
    sc = (gamma / jnp.sqrt(run_var + BN_EPS)).reshape(1, -1, 1, 1, 1)
    y = (y - run_mean.reshape(1, -1, 1, 1, 1)) * sc + beta.reshape(1, -1, 1, 1, 1)
    v = y / TAU
    return (v >= V_TH).astype(x.dtype), v


if __name__ == "__main__":
    key = jax.random.PRNGKey(0)
    k_x, k_w, k_b, k_g, k_be, k_m, k_v = jax.random.split(key, 7)

    N, C, D, H, W = 2, 4, 16, 16, 16
    E = 32
    patch = (4, 4, 4)

    x = jax.random.normal(k_x, (N, C, D, H, W), dtype=jnp.float32)

    # Deterministic synthetic parameters (Conv3d weight/bias, BN gamma/beta/running stats).
    weight = 0.2 * jax.random.normal(k_w, (E, C) + patch, dtype=jnp.float32)
    bias = 0.1 * jax.random.normal(k_b, (E,), dtype=jnp.float32)
    gamma = 1.0 + 0.1 * jax.random.normal(k_g, (E,), dtype=jnp.float32)
    beta = 0.1 * jax.random.normal(k_be, (E,), dtype=jnp.float32)
    run_mean = 0.1 * jax.random.normal(k_m, (E,), dtype=jnp.float32)
    run_var = 1.0 + 0.1 * jax.random.uniform(k_v, (E,), dtype=jnp.float32)

    out = spiking_patch_embedding(x, weight, bias, gamma, beta, run_mean, run_var, patch)
    out = jax.block_until_ready(out)

    ref_spk, ref_v = reference(x, weight, bias, gamma, beta, run_mean, run_var, patch)
    ref_spk = jax.block_until_ready(ref_spk)

    assert out.shape == (N, E, D // 4, H // 4, W // 4), out.shape
    # Boundary-tolerant check: membrane values within fp-noise of the threshold may
    # legitimately flip under the re-associated (scale-folded) matmul.
    ref_v_np = np.asarray(ref_v)
    mask = np.abs(ref_v_np - V_TH) > 1e-4
    np.testing.assert_array_equal(np.asarray(out)[mask], np.asarray(ref_spk)[mask])

    print("KERNEL_OK")
</pallas_src>

<mosaic_0001>
module attributes {stable_mosaic.version = 11 : i64} {
  func.func @_patch_embed_kernel(%arg0: i32, %arg1: memref<32x256xf32, #tpu.memory_space<vmem>>, %arg2: memref<256x128xf32, #tpu.memory_space<vmem>>, %arg3: memref<32x1xf32, #tpu.memory_space<vmem>>, %arg4: memref<32x128xf32, #tpu.memory_space<vmem>>) attributes {dimension_semantics = [#tpu.dimension_semantics<parallel>], iteration_bounds = array<i64: 1>, scalar_prefetch = 0 : i64, scratch_operands = 0 : i64, tpu.core_type = #tpu.core_type<tc>, window_params = [{pipeline_mode = #tpu.pipeline_mode<synchronous>, transform_indices = @transform_0, window_bounds = array<i64: 32, 256>}, {transform_indices = @transform_1, window_bounds = array<i64: 256, 128>}, {pipeline_mode = #tpu.pipeline_mode<synchronous>, transform_indices = @transform_2, window_bounds = array<i64: 32, 1>}, {transform_indices = @transform_3, window_bounds = array<i64: 32, 128>}]} {
    %c0 = arith.constant 0 : index
    %c0_0 = arith.constant 0 : index
    %0 = vector.load %arg1[%c0, %c0_0] : memref<32x256xf32, #tpu.memory_space<vmem>>, vector<32x256xf32>
    %c0_1 = arith.constant 0 : index
    %c0_2 = arith.constant 0 : index
    %1 = vector.load %arg2[%c0_1, %c0_2] : memref<256x128xf32, #tpu.memory_space<vmem>>, vector<256x128xf32>
    %cst = arith.constant dense<0.000000e+00> : vector<32x128xf32>
    %2 = tpu.matmul %0, %1, %cst {dimension_numbers = #tpu.dot_dimension_numbers<[1], [0], [0], [1], [0, 0, 1, 1], [], []>} : vector<32x256xf32>, vector<256x128xf32>, vector<32x128xf32> -> vector<32x128xf32>
    %c0_3 = arith.constant 0 : index
    %c0_4 = arith.constant 0 : index
    %3 = vector.load %arg3[%c0_3, %c0_4] : memref<32x1xf32, #tpu.memory_space<vmem>>, vector<32x1xf32>
    %4 = vector.broadcast %3 : vector<32x1xf32> to vector<32x128xf32>
    %5 = arith.cmpf oge, %2, %4 : vector<32x128xf32>
    %6 = arith.extui %5 : vector<32x128xi1> to vector<32x128xi32>
    %7 = arith.sitofp %6 : vector<32x128xi32> to vector<32x128xf32>
    %c0_5 = arith.constant 0 : index
    %c0_6 = arith.constant 0 : index
    %8 = vector.load %arg4[%c0_5, %c0_6] : memref<32x128xf32, #tpu.memory_space<vmem>>, vector<32x128xf32>
    tpu.vector_store %arg4[%c0_5, %c0_6], %7 {strides = array<i32>} : memref<32x128xf32, #tpu.memory_space<vmem>>, vector<32x128xf32>,
    return
  }
  func.func @transform_0(%arg0: i32) -> (i32, i32) {
    %c0_i32 = arith.constant 0 : i32
    %c0_i32_0 = arith.constant 0 : i32
    %c0_i32_1 = arith.constant 0 : i32
    return %c0_i32, %c0_i32_0 : i32, i32
  }
  func.func @transform_1(%arg0: i32) -> (i32, i32) {
    %c0_i32 = arith.constant 0 : i32
    %c0_i32_0 = arith.constant 0 : i32
    return %c0_i32, %arg0 : i32, i32
  }
  func.func @transform_2(%arg0: i32) -> (i32, i32) {
    %c0_i32 = arith.constant 0 : i32
    %c0_i32_0 = arith.constant 0 : i32
    %c0_i32_1 = arith.constant 0 : i32
    return %c0_i32, %c0_i32_0 : i32, i32
  }
  func.func @transform_3(%arg0: i32) -> (i32, i32) {
    %c0_i32 = arith.constant 0 : i32
    %c0_i32_0 = arith.constant 0 : i32
    return %c0_i32, %arg0 : i32, i32
  }
}

</mosaic_0001>

<llo_original>
// kernel: tpu_custom_call.1
$region0: #{tpu_custom_call.1}
  #allocation0 [shape = 'u32[]', space=smem, size = 0x4, offset = 0x4, fixed_abs, tag = 'smem constant byte address 0x4 - core index']
  #allocation1 [shape = 'u32[144,128]{1,0:T(1,128)}', space=vmem, size = 0x12000, scoped, tag = 'internal scratch']
  %s0 = inlined_call_operand.hbm [shape: f32[32,256], index: 0, kind: input, shape index: {}]
  %s1 = inlined_call_operand.hbm [shape: f32[256,128], index: 1, kind: input, shape index: {}]
  %s2 = inlined_call_operand.vmem [shape: f32[32,1], index: 2, kind: input, shape index: {}]
  %s3 = inlined_call_operand.hbm [shape: f32[32,128], index: 3, kind: output, shape index: {}]
  %s4 = sld [smem:[#allocation0]]
  $region30: #{tpu_custom_call.1} parent=0
    _
  %s6 = ssub.s32 1, %s4
  %s7 = scalar_select 0, %s6, %s4
  $region1: #{tpu_custom_call.1} parent=0
    #allocation2 [shape = 'u8[32768]{0}', space=vmem, size = 0x8000, scoped, tag = 'input window, operand 0, single buffered']
    #allocation3 [shape = 's32[1]{0}', space=sflag, size = 0x4, scoped, tag = 'scoped memory for tpu_custom_call.1']
    #allocation4 [shape = 's32[1]{0}', space=sflag, size = 0x4, scoped, tag = 'scoped memory for tpu_custom_call.1']
    #allocation5 [shape = 'u8[131072]{0}', space=vmem, size = 0x20000, scoped, tag = 'input window, operand 1, single buffered']
    #allocation6 [shape = 's32[1]{0}', space=sflag, size = 0x4, scoped, tag = 'scoped memory for tpu_custom_call.1']
    #allocation7 [shape = 'u8[16384]{0}', space=vmem, size = 0x4000, scoped, tag = 'output window, operand 0, single buffered']
    %8 = vsyncpa [#allocation3], 0
    %9 = vsyncpa [#allocation6], 0
    %10 = vsyncpa [#allocation4], 0
    // Predicated region
    $region2: #{tpu_custom_call.1} parent=1 // pred_check
      _
    $region3: #{tpu_custom_call.1} parent=1 // pred_check_branch
      %12 = sbr.rel (0) target = $region5
    $region4: #{tpu_custom_call.1} parent=1 // pred_region
      %s14 = ssub.s32 1024, 1024
      %15 = vsyncadd [#allocation3], %s14
      %s16 = sshll.u32 [#allocation2], 4
      %s17 = int_to_ptr.vmem [resolvable:$true] %s16
      %22 = dma.hbm_to_vmem [thread:$0]  %s0, 1024, %s17, [#allocation3], 256, 256, 16
    $region5: #{tpu_custom_call.1} parent=1 // pred_fallthru
      _
    // Predicated region
    $region6: #{tpu_custom_call.1} parent=1 // pred_check
      _
    $region7: #{tpu_custom_call.1} parent=1 // pred_check_branch
      %24 = sbr.rel (0) target = $region9
    $region8: #{tpu_custom_call.1} parent=1 // pred_region
      %s26 = ssub.s32 4096, 4096
      %27 = vsyncadd [#allocation6], %s26
      %s28 = sshll.u32 [#allocation5], 4
      %s29 = int_to_ptr.vmem [resolvable:$true] %s28
      %34 = dma.hbm_to_vmem [thread:$0]  %s1, 4096, %s29, [#allocation6], 128, 128, 8
    $region9: #{tpu_custom_call.1} parent=1 // pred_fallthru
      _
    // Predicated region
    $region10: #{tpu_custom_call.1} parent=1 // pred_check
      _
    $region11: #{tpu_custom_call.1} parent=1 // pred_check_branch
      %36 = sbr.rel (0) target = $region13
    $region12: #{tpu_custom_call.1} parent=1 // pred_region
      _
    $region13: #{tpu_custom_call.1} parent=1 // pred_fallthru
      _
    // Predicated region
    $region14: #{tpu_custom_call.1} parent=1 // pred_check
      _
    $region15: #{tpu_custom_call.1} parent=1 // pred_check_branch
      %38 = sbr.rel (0) target = $region17
    $region16: #{tpu_custom_call.1} parent=1 // pred_region
      %39 = dma.done [#allocation3], 1024
    $region17: #{tpu_custom_call.1} parent=1 // pred_fallthru
      _
    // Predicated region
    $region18: #{tpu_custom_call.1} parent=1 // pred_check
      _
    $region19: #{tpu_custom_call.1} parent=1 // pred_check_branch
      %41 = sbr.rel (0) target = $region21
    $region20: #{tpu_custom_call.1} parent=1 // pred_region
      %42 = dma.done [#allocation6], 4096
    $region21: #{tpu_custom_call.1} parent=1 // pred_fallthru
      _
    %v43 = vld [vmem:[#allocation2] sm:$0xff]
    %v44 = vld [vmem:[#allocation2 + $0x8] sm:$0xff]
    %v45 = vld [vmem:[#allocation2 + $0x10] sm:$0xff]
    %v46 = vld [vmem:[#allocation2 + $0x18] sm:$0xff]
    %v47 = vld [vmem:[#allocation2 + $0x20] sm:$0xff]
    %v48 = vld [vmem:[#allocation2 + $0x28] sm:$0xff]
    %v49 = vld [vmem:[#allocation2 + $0x30] sm:$0xff]
    %v50 = vld [vmem:[#allocation2 + $0x38] sm:$0xff]
    %v51 = vld [vmem:[#allocation5] sm:$0xff]
    %v52 = vld [vmem:[#allocation5 + $0x8] sm:$0xff]
    %v53 = vld [vmem:[#allocation5 + $0x10] sm:$0xff]
    %v54 = vld [vmem:[#allocation5 + $0x18] sm:$0xff]
    %v55 = vld [vmem:[#allocation5 + $0x20] sm:$0xff]
    %v56 = vld [vmem:[#allocation5 + $0x28] sm:$0xff]
    %v57 = vld [vmem:[#allocation5 + $0x30] sm:$0xff]
    %v58 = vld [vmem:[#allocation5 + $0x38] sm:$0xff]
    %v59 = vld [vmem:[#allocation5 + $0x40] sm:$0xff]
    %v60 = vld [vmem:[#allocation5 + $0x48] sm:$0xff]
    %v61 = vld [vmem:[#allocation5 + $0x50] sm:$0xff]
    %v62 = vld [vmem:[#allocation5 + $0x58] sm:$0xff]
    %v63 = vld [vmem:[#allocation5 + $0x60] sm:$0xff]
    %v64 = vld [vmem:[#allocation5 + $0x68] sm:$0xff]
    %v65 = vld [vmem:[#allocation5 + $0x70] sm:$0xff]
    %v66 = vld [vmem:[#allocation5 + $0x78] sm:$0xff]
    %v67 = vld [vmem:[#allocation5 + $0x80] sm:$0xff]
    %v68 = vld [vmem:[#allocation5 + $0x88] sm:$0xff]
    %v69 = vld [vmem:[#allocation5 + $0x90] sm:$0xff]
    %v70 = vld [vmem:[#allocation5 + $0x98] sm:$0xff]
    %v71 = vld [vmem:[#allocation5 + $0xa0] sm:$0xff]
    %v72 = vld [vmem:[#allocation5 + $0xa8] sm:$0xff]
    %v73 = vld [vmem:[#allocation5 + $0xb0] sm:$0xff]
    %v74 = vld [vmem:[#allocation5 + $0xb8] sm:$0xff]
    %v75 = vld [vmem:[#allocation5 + $0xc0] sm:$0xff]
    %v76 = vld [vmem:[#allocation5 + $0xc8] sm:$0xff]
    %v77 = vld [vmem:[#allocation5 + $0xd0] sm:$0xff]
    %v78 = vld [vmem:[#allocation5 + $0xd8] sm:$0xff]
    %v79 = vld [vmem:[#allocation5 + $0xe0] sm:$0xff]
    %v80 = vld [vmem:[#allocation5 + $0xe8] sm:$0xff]
    %v81 = vld [vmem:[#allocation5 + $0xf0] sm:$0xff]
    %v82 = vld [vmem:[#allocation5 + $0xf8] sm:$0xff]
    %83 = vmatprep.subr.mxu0 0.0
    %84 = vmatpush1.msra.mxu0 %v66
    %85 = vmatprep.subr.mxu0 0.0
    %86 = vmatpush1.msra.mxu0 %v65
    %87 = vmatprep.subr.mxu0 0.0
    %88 = vmatpush1.msra.mxu0 %v64
    %89 = vmatprep.subr.mxu0 0.0
    %90 = vmatpush1.msra.mxu0 %v63
    %91 = vmatprep.subr.mxu0 0.0
    %92 = vmatpush1.msra.mxu0 %v62
    %93 = vmatprep.subr.mxu0 0.0
    %94 = vmatpush1.msra.mxu0 %v61
    %95 = vmatprep.subr.mxu0 0.0
    %96 = vmatpush1.msra.mxu0 %v60
    %97 = vmatprep.subr.mxu0 0.0
    %98 = vmatpush1.msra.mxu0 %v59
    %99 = vmatprep.subr.mxu0 0.0
    %100 = vmatpush1.msra.mxu0 %v58
    %101 = vmatprep.subr.mxu0 0.0
    %102 = vmatpush1.msra.mxu0 %v57
    %103 = vmatprep.subr.mxu0 0.0
    %104 = vmatpush1.msra.mxu0 %v56
    %105 = vmatprep.subr.mxu0 0.0
    %106 = vmatpush1.msra.mxu0 %v55
    %107 = vmatprep.subr.mxu0 0.0
    %108 = vmatpush1.msra.mxu0 %v54
    %109 = vmatprep.subr.mxu0 0.0
    %110 = vmatpush1.msra.mxu0 %v53
    %111 = vmatprep.subr.mxu0 0.0
    %112 = vmatpush1.msra.mxu0 %v52
    %113 = vmatprep.subr.mxu0 0.0
    %114 = vmatpush1.msra.mxu0 %v51
    %115 = vmatprep.subr.mxu0 0.0
    %116 = vmatpush2.msra.mxu0 %v82
    %117 = vmatprep.subr.mxu0 0.0
    %118 = vmatpush2.msra.mxu0 %v81
    %119 = vmatprep.subr.mxu0 0.0
    %120 = vmatpush2.msra.mxu0 %v80
    %121 = vmatprep.subr.mxu0 0.0
    %122 = vmatpush2.msra.mxu0 %v79
    %123 = vmatprep.subr.mxu0 0.0
    %124 = vmatpush2.msra.mxu0 %v78
    %125 = vmatprep.subr.mxu0 0.0
    %126 = vmatpush2.msra.mxu0 %v77
    %127 = vmatprep.subr.mxu0 0.0
    %128 = vmatpush2.msra.mxu0 %v76
    %129 = vmatprep.subr.mxu0 0.0
    %130 = vmatpush2.msra.mxu0 %v75
    %131 = vmatprep.subr.mxu0 0.0
    %132 = vmatpush2.msra.mxu0 %v74
    %133 = vmatprep.subr.mxu0 0.0
    %134 = vmatpush2.msra.mxu0 %v73
    %135 = vmatprep.subr.mxu0 0.0
    %136 = vmatpush2.msra.mxu0 %v72
    %137 = vmatprep.subr.mxu0 0.0
    %138 = vmatpush2.msra.mxu0 %v71
    %139 = vmatprep.subr.mxu0 0.0
    %140 = vmatpush2.msra.mxu0 %v70
    %141 = vmatprep.subr.mxu0 0.0
    %142 = vmatpush2.msra.mxu0 %v69
    %143 = vmatprep.subr.mxu0 0.0
    %144 = vmatpush2.msra.mxu0 %v68
    %145 = vmatprep.subr.mxu0 0.0
    %146 = vmatpush2.msra.mxu0 %v67
    %147 = vmatprep.mubr.f32.mxu0 %v44
    %148 = vmatmul.mubr.f32.gmra.mxu0 %v43
    %v149 = vpop.f32.mrf.mxu0
    %v150 = vadd.f32 0.0, %v149
    %v151 = vpop.f32.mrf.mxu0
    %152 = vmatprep.mubr.f32.mxu0 %v46
    %153 = vmatmul.mubr.f32.gmra.mxu0 %v45
    %v154 = vpop.f32.mrf.mxu0
    %v155 = vadd.f32 0.0, %v154
    %v156 = vpop.f32.mrf.mxu0
    %157 = vmatprep.mubr.f32.mxu0 %v48
    %158 = vmatmul.mubr.f32.gmra.mxu0 %v47
    %v159 = vpop.f32.mrf.mxu0
    %v160 = vadd.f32 0.0, %v159
    %v161 = vpop.f32.mrf.mxu0
    %162 = vmatprep.mubr.f32.mxu0 %v50
    %163 = vmatmul.mubr.f32.gmra.mxu0 %v49
    %v164 = vpop.f32.mrf.mxu0
    %v165 = vadd.f32 0.0, %v164
    %v166 = vpop.f32.mrf.mxu0
    %167 = vdwg.mxu0
    %v168 = vld [vmem:[%s2] sm:$0xff]
    %v169 = vld [vmem:[%s2 + $0x8] sm:$0xff]
    %v170 = vld [vmem:[%s2 + $0x10] sm:$0xff]
    %v171 = vld [vmem:[%s2 + $0x18] sm:$0xff]
    %173 = vset.pattern.permute.xlu0 0
    %174 = vperm.xlu0 %173, %v168
    %v175 = vpop.permute.xlu0 %174
    %178 = vset.pattern.permute.xlu0 0
    %179 = vperm.xlu0 %178, %v169
    %v180 = vpop.permute.xlu0 %179
    %183 = vset.pattern.permute.xlu0 0
    %184 = vperm.xlu0 %183, %v170
    %v185 = vpop.permute.xlu0 %184
    %188 = vset.pattern.permute.xlu0 0
    %189 = vperm.xlu0 %188, %v171
    %v190 = vpop.permute.xlu0 %189
    %vm192 = vcmp.ge.f32.partialorder %v150, %v175
    %vm193 = vcmp.ge.f32.partialorder %v155, %v180
    %vm194 = vcmp.ge.f32.partialorder %v160, %v185
    %vm195 = vcmp.ge.f32.partialorder %v165, %v190
    %v196 = vsel %vm192, 1, 0
    %v197 = vsel %vm193, 1, 0
    %v198 = vsel %vm194, 1, 0
    %v199 = vsel %vm195, 1, 0
    %v200 = vcvt.s32.f32 %v196
    %v201 = vcvt.s32.f32 %v197
    %v202 = vcvt.s32.f32 %v198
    %v203 = vcvt.s32.f32 %v199
    %204 = vst [vmem:[#allocation7] sm:$0xff] %v200
    %205 = vst [vmem:[#allocation7 + $0x8] sm:$0xff] %v201
    %206 = vst [vmem:[#allocation7 + $0x10] sm:$0xff] %v202
    %207 = vst [vmem:[#allocation7 + $0x18] sm:$0xff] %v203
    // Predicated region
    $region22: #{tpu_custom_call.1} parent=1 // pred_check
      _
    $region23: #{tpu_custom_call.1} parent=1 // pred_check_branch
      %209 = sbr.rel (0) target = $region25
    $region24: #{tpu_custom_call.1} parent=1 // pred_region
      %s211 = ssub.s32 512, 512
      %212 = vsyncadd [#allocation4], %s211
      %s213 = sshll.u32 [#allocation7], 4
      %s214 = int_to_ptr.vmem [resolvable:$true] %s213
      %219 = dma.vmem_to_hbm [thread:$0]  %s214, 512, %s3, [#allocation4], 128, 128, 8
    $region25: #{tpu_custom_call.1} parent=1 // pred_fallthru
      _
    // Predicated region
    $region26: #{tpu_custom_call.1} parent=1 // pred_check
      _
    $region27: #{tpu_custom_call.1} parent=1 // pred_check_branch
      %221 = sbr.rel (0) target = $region29
    $region28: #{tpu_custom_call.1} parent=1 // pred_region
      %222 = dma.done [#allocation4], 512
    $region29: #{tpu_custom_call.1} parent=1 // pred_fallthru
      _
    %223 = vsyncpa [#allocation3], 1
    %224 = vsyncpa [#allocation6], 1
    %225 = vsyncpa [#allocation4], 1

</llo_original>
